<compile_context>
chip_gen: v6e
topology: v6e:2x2x1
jax: 0.10.0
libtpu: 0.0.40
codegen_flags: <defaults>
</compile_context>

<pallas_src>
import jax
import jax.numpy as jnp
from jax.experimental import pallas as pl
from jax.experimental.pallas import tpu as pltpu

IN_FEATURES = 28 * 28      # 784
HIDDEN = 100
OUT_FEATURES = 10

HIDDEN_PAD = 128           # 100 -> 128 (zero-padded weight columns)
OUT_PAD = 128              # second matmul width (only first 10 columns stored)
TB_DEFAULT = 2048          # batch-tile rows; good on v5e/v6e/v7x


def _round_up(n, m):
    return ((n + m - 1) // m) * m


def _mlp_kernel(x_ref, w1_ref, b1_ref, w2_ref, b2_ref, o_ref):
    # x_ref:  (TB, 784) f32       w1_ref: (784, 128) bf16   b1_ref: (1, 128) f32
    # w2_ref: (128, 128) bf16     b2_ref: (1, 128)  f32     o_ref:  (TB, 10) f32
    x = x_ref[...].astype(jnp.bfloat16)                 # VPU cast, hidden under x DMA
    h = jnp.dot(x, w1_ref[...], preferred_element_type=jnp.float32)     # MXU, f32 acc
    h = jnp.maximum(h + b1_ref[...], 0.0)                               # bias + ReLU
    y = jnp.dot(h.astype(jnp.bfloat16), w2_ref[...],
                preferred_element_type=jnp.float32)                     # MXU, f32 acc
    y = y + b2_ref[...]
    o_ref[...] = y[:, :OUT_FEATURES].astype(o_ref.dtype)  # store only real 10 columns


def _prepare_params(w1, b1, w2, b2):
    """Cast weights to bf16 and zero-pad hidden/out dims to 128 lanes."""
    w1p = jnp.zeros((IN_FEATURES, HIDDEN_PAD), jnp.bfloat16)
    w1p = w1p.at[:, :HIDDEN].set(w1.astype(jnp.bfloat16))
    b1p = jnp.zeros((1, HIDDEN_PAD), jnp.float32)
    b1p = b1p.at[:, :HIDDEN].set(b1.reshape(1, -1).astype(jnp.float32))
    w2p = jnp.zeros((HIDDEN_PAD, OUT_PAD), jnp.bfloat16)
    w2p = w2p.at[:HIDDEN, :OUT_FEATURES].set(w2.astype(jnp.bfloat16))
    b2p = jnp.zeros((1, OUT_PAD), jnp.float32)
    b2p = b2p.at[:, :OUT_FEATURES].set(b2.reshape(1, -1).astype(jnp.float32))
    return w1p, b1p, w2p, b2p


def _choose_tile(B, tb):
    """Pick batch-tile rows: single full-extent block for small B, otherwise an
    even number (>=2) of tiles so both v7x TensorCores get work."""
    tb = max(8, _round_up(tb, 8))
    if B <= min(tb, 256):
        return B                              # one full-extent block (always legal)
    n_tiles = max(2, pl.cdiv(B, tb))
    n_tiles += n_tiles & 1                    # prefer an even tile count (megacore)
    return max(8, _round_up(pl.cdiv(B, n_tiles), 8))


def number_network_forward(x, w1, b1, w2, b2, *, tb=TB_DEFAULT, force_pallas=False):
    """x: (B, 1, 28, 28) or (B, 28, 28) float32 -> (B, 10) float32."""
    B = x.shape[0]
    x_flat = x.reshape(B, -1)                 # nn.Flatten() (metadata-only)
    assert x_flat.shape[1] == IN_FEATURES

    # Tiny-batch fallback: per-call / per-grid-step overhead dominates there.
    if B < 128 and not force_pallas:
        return jnp.maximum(x_flat @ w1 + b1.reshape(1, -1), 0.0) @ w2 + b2.reshape(1, -1)

    w1p, b1p, w2p, b2p = _prepare_params(w1, b1, w2, b2)

    tb_eff = _choose_tile(B, tb)
    grid = (pl.cdiv(B, tb_eff),)              # ragged last tile handled by Pallas

    x_spec = pl.BlockSpec((tb_eff, IN_FEATURES), lambda i: (i, 0))
    const = lambda shape: pl.BlockSpec(shape, lambda i: (0, 0))     # VMEM-resident params
    out_spec = pl.BlockSpec((tb_eff, OUT_FEATURES), lambda i: (i, 0))

    flops = 2 * B * (IN_FEATURES * HIDDEN_PAD + HIDDEN_PAD * OUT_PAD)
    bytes_accessed = (B * IN_FEATURES * 4                                   # x (f32)
                      + (IN_FEATURES * HIDDEN_PAD + HIDDEN_PAD * OUT_PAD) * 2  # weights
                      + (HIDDEN_PAD + OUT_PAD) * 4                          # biases
                      + B * OUT_FEATURES * 4)                               # output (f32)

    # Explicit VMEM budget: double-buffered x + out, resident weights, headroom
    # for the (tb, 128) f32 intermediates.  Safe on v5e (128 MiB physical) and
    # under v7x's 64 MiB per-TC physical VMEM for the default tile.
    vmem_bytes = min(
        60 * 1024 * 1024,
        2 * tb_eff * IN_FEATURES * 4
        + 2 * _round_up(tb_eff, 8) * 128 * 4
        + 2 * (IN_FEATURES * HIDDEN_PAD + HIDDEN_PAD * OUT_PAD) * 2
        + 8 * 1024 * 1024)

    out = pl.pallas_call(
        _mlp_kernel,
        out_shape=jax.ShapeDtypeStruct((B, OUT_FEATURES), jnp.float32),
        grid=grid,
        in_specs=[
            x_spec,
            const((IN_FEATURES, HIDDEN_PAD)),
            const((1, HIDDEN_PAD)),
            const((HIDDEN_PAD, OUT_PAD)),
            const((1, OUT_PAD)),
        ],
        out_specs=out_spec,
        compiler_params=pltpu.CompilerParams(
            dimension_semantics=("parallel",),          # both TCs on v7x
            vmem_limit_bytes=vmem_bytes),
        cost_estimate=pl.CostEstimate(
            flops=flops, transcendentals=0, bytes_accessed=bytes_accessed),
    )(x_flat, w1p, b1p, w2p, b2p)

    return out


def init_params(key):
    """Deterministic PyTorch-style uniform(-1/sqrt(fan_in), 1/sqrt(fan_in)) init."""
    k1, k2, k3, k4 = jax.random.split(key, 4)
    bound1 = 1.0 / (IN_FEATURES ** 0.5)
    bound2 = 1.0 / (HIDDEN ** 0.5)
    w1 = jax.random.uniform(k1, (IN_FEATURES, HIDDEN), jnp.float32, -bound1, bound1)
    b1 = jax.random.uniform(k2, (1, HIDDEN), jnp.float32, -bound1, bound1)
    w2 = jax.random.uniform(k3, (HIDDEN, OUT_FEATURES), jnp.float32, -bound2, bound2)
    b2 = jax.random.uniform(k4, (1, OUT_FEATURES), jnp.float32, -bound2, bound2)
    return w1, b1, w2, b2


def _reference(x, w1, b1, w2, b2):
    B = x.shape[0]
    x_flat = x.reshape(B, -1)
    return jnp.maximum(x_flat @ w1 + b1, 0.0) @ w2 + b2


if __name__ == "__main__":
    key = jax.random.PRNGKey(0)
    kx, kx2, kp = jax.random.split(key, 3)
    w1, b1, w2, b2 = init_params(kp)

    # 1) Small batch (B=2), forced through the Pallas path (single full-extent tile).
    B = 2
    x = jax.random.normal(kx, (B, 1, 28, 28), jnp.float32)          # NCHW, like MNIST
    out = number_network_forward(x, w1, b1, w2, b2, force_pallas=True)
    out = jax.block_until_ready(out)
    ref = _reference(x, w1, b1, w2, b2)
    assert out.shape == (B, OUT_FEATURES)
    # bf16 activations/weights with f32 accumulation -> loosened tolerance.
    assert jnp.allclose(out, ref, atol=3e-2, rtol=3e-2), "B=2 mismatch"

    # 2) Ragged multi-tile grid (>=2 tiles for megacore; partial last block).
    B2 = 300
    x2 = jax.random.normal(kx2, (B2, 1, 28, 28), jnp.float32)
    out2 = number_network_forward(x2, w1, b1, w2, b2)               # default tb -> grid=(2,)
    out2 = jax.block_until_ready(out2)
    ref2 = _reference(x2, w1, b1, w2, b2)
    assert out2.shape == (B2, OUT_FEATURES)
    assert jnp.allclose(out2, ref2, atol=3e-2, rtol=3e-2), "B=300 mismatch"

    # 3) Same ragged batch with a small tile (exercises a longer, even grid).
    out3 = number_network_forward(x2, w1, b1, w2, b2, tb=128)       # grid=(4,)
    out3 = jax.block_until_ready(out3)
    assert jnp.allclose(out3, ref2, atol=3e-2, rtol=3e-2), "B=300 tb=128 mismatch"

    print("KERNEL_OK")
</pallas_src>

<mosaic_0001>
module attributes {stable_mosaic.version = 11 : i64} {
  func.func @_mlp_kernel(%arg0: i32, %arg1: memref<2x784xf32, #tpu.memory_space<vmem>>, %arg2: memref<784x128xbf16, #tpu.memory_space<vmem>>, %arg3: memref<1x128xf32, #tpu.memory_space<vmem>>, %arg4: memref<128x128xbf16, #tpu.memory_space<vmem>>, %arg5: memref<1x128xf32, #tpu.memory_space<vmem>>, %arg6: memref<2x10xf32, #tpu.memory_space<vmem>>) attributes {dimension_semantics = [#tpu.dimension_semantics<parallel>], iteration_bounds = array<i64: 1>, scalar_prefetch = 0 : i64, scratch_operands = 0 : i64, tpu.core_type = #tpu.core_type<tc>, window_params = [{transform_indices = @transform_0, window_bounds = array<i64: 2, 784>}, {pipeline_mode = #tpu.pipeline_mode<synchronous>, transform_indices = @transform_1, window_bounds = array<i64: 784, 128>}, {pipeline_mode = #tpu.pipeline_mode<synchronous>, transform_indices = @transform_2, window_bounds = array<i64: 1, 128>}, {pipeline_mode = #tpu.pipeline_mode<synchronous>, transform_indices = @transform_3, window_bounds = array<i64: 128, 128>}, {pipeline_mode = #tpu.pipeline_mode<synchronous>, transform_indices = @transform_4, window_bounds = array<i64: 1, 128>}, {transform_indices = @transform_5, window_bounds = array<i64: 2, 10>}]} {
    %c0 = arith.constant 0 : index
    %c0_0 = arith.constant 0 : index
    %0 = vector.load %arg1[%c0, %c0_0] : memref<2x784xf32, #tpu.memory_space<vmem>>, vector<2x784xf32>
    %1 = arith.truncf %0 : vector<2x784xf32> to vector<2x784xbf16>
    %c0_1 = arith.constant 0 : index
    %c0_2 = arith.constant 0 : index
    %2 = vector.load %arg2[%c0_1, %c0_2] : memref<784x128xbf16, #tpu.memory_space<vmem>>, vector<784x128xbf16>
    %cst = arith.constant dense<0.000000e+00> : vector<2x128xf32>
    %3 = tpu.matmul %1, %2, %cst {dimension_numbers = #tpu.dot_dimension_numbers<[1], [0], [0], [1], [0, 0, 1, 1], [], []>} : vector<2x784xbf16>, vector<784x128xbf16>, vector<2x128xf32> -> vector<2x128xf32>
    %c0_3 = arith.constant 0 : index
    %c0_4 = arith.constant 0 : index
    %4 = vector.load %arg3[%c0_3, %c0_4] : memref<1x128xf32, #tpu.memory_space<vmem>>, vector<1x128xf32>
    %5 = vector.broadcast %4 : vector<1x128xf32> to vector<2x128xf32>
    %6 = arith.addf %3, %5 : vector<2x128xf32>
    %cst_5 = arith.constant 0.000000e+00 : f32
    %7 = vector.broadcast %cst_5 : f32 to vector<2x128xf32>
    %8 = arith.maximumf %6, %7 : vector<2x128xf32>
    %9 = arith.truncf %8 : vector<2x128xf32> to vector<2x128xbf16>
    %c0_6 = arith.constant 0 : index
    %c0_7 = arith.constant 0 : index
    %10 = vector.load %arg4[%c0_6, %c0_7] : memref<128x128xbf16, #tpu.memory_space<vmem>>, vector<128x128xbf16>
    %cst_8 = arith.constant dense<0.000000e+00> : vector<2x128xf32>
    %11 = tpu.matmul %9, %10, %cst_8 {dimension_numbers = #tpu.dot_dimension_numbers<[1], [0], [0], [1], [0, 0, 1, 1], [], []>} : vector<2x128xbf16>, vector<128x128xbf16>, vector<2x128xf32> -> vector<2x128xf32>
    %c0_9 = arith.constant 0 : index
    %c0_10 = arith.constant 0 : index
    %12 = vector.load %arg5[%c0_9, %c0_10] : memref<1x128xf32, #tpu.memory_space<vmem>>, vector<1x128xf32>
    %13 = vector.broadcast %12 : vector<1x128xf32> to vector<2x128xf32>
    %14 = arith.addf %11, %13 : vector<2x128xf32>
    %15 = vector.extract_strided_slice %14 {offsets = [0, 0], sizes = [2, 10], strides = [1, 1]} : vector<2x128xf32> to vector<2x10xf32>
    %c0_11 = arith.constant 0 : index
    %c0_12 = arith.constant 0 : index
    %16 = vector.load %arg6[%c0_11, %c0_12] : memref<2x10xf32, #tpu.memory_space<vmem>>, vector<2x10xf32>
    tpu.vector_store %arg6[%c0_11, %c0_12], %15 {strides = array<i32>} : memref<2x10xf32, #tpu.memory_space<vmem>>, vector<2x10xf32>,
    return
  }
  func.func @transform_0(%arg0: i32) -> (i32, i32) {
    %c0_i32 = arith.constant 0 : i32
    %c0_i32_0 = arith.constant 0 : i32
    return %arg0, %c0_i32 : i32, i32
  }
  func.func @transform_1(%arg0: i32) -> (i32, i32) {
    %c0_i32 = arith.constant 0 : i32
    %c0_i32_0 = arith.constant 0 : i32
    %c0_i32_1 = arith.constant 0 : i32
    return %c0_i32, %c0_i32_0 : i32, i32
  }
  func.func @transform_2(%arg0: i32) -> (i32, i32) {
    %c0_i32 = arith.constant 0 : i32
    %c0_i32_0 = arith.constant 0 : i32
    %c0_i32_1 = arith.constant 0 : i32
    return %c0_i32, %c0_i32_0 : i32, i32
  }
  func.func @transform_3(%arg0: i32) -> (i32, i32) {
    %c0_i32 = arith.constant 0 : i32
    %c0_i32_0 = arith.constant 0 : i32
    %c0_i32_1 = arith.constant 0 : i32
    return %c0_i32, %c0_i32_0 : i32, i32
  }
  func.func @transform_4(%arg0: i32) -> (i32, i32) {
    %c0_i32 = arith.constant 0 : i32
    %c0_i32_0 = arith.constant 0 : i32
    %c0_i32_1 = arith.constant 0 : i32
    return %c0_i32, %c0_i32_0 : i32, i32
  }
  func.func @transform_5(%arg0: i32) -> (i32, i32) {
    %c0_i32 = arith.constant 0 : i32
    %c0_i32_0 = arith.constant 0 : i32
    return %arg0, %c0_i32 : i32, i32
  }
}

</mosaic_0001>

<llo_original>
// kernel: tpu_custom_call.1
$region0: #{tpu_custom_call.1}
  #allocation0 [shape = 'u32[]', space=smem, size = 0x4, offset = 0x4, fixed_abs, tag = 'smem constant byte address 0x4 - core index']
  #allocation1 [shape = 'u32[144,128]{1,0:T(1,128)}', space=vmem, size = 0x12000, scoped, tag = 'internal scratch']
  %s0 = inlined_call_operand.hbm [shape: f32[2,784], index: 0, kind: input, shape index: {}]
  %s1 = inlined_call_operand.hbm [shape: bf16[784,128], index: 1, kind: input, shape index: {}]
  %s2 = inlined_call_operand.vmem [shape: f32[1,128], index: 2, kind: input, shape index: {}]
  %s3 = inlined_call_operand.hbm [shape: bf16[128,128], index: 3, kind: input, shape index: {}]
  %s4 = inlined_call_operand.vmem [shape: f32[1,128], index: 4, kind: input, shape index: {}]
  %s5 = inlined_call_operand.hbm [shape: f32[2,10], index: 5, kind: output, shape index: {}]
  %s6 = sld [smem:[#allocation0]]
  $region42: #{tpu_custom_call.1} parent=0
    _
  %s8 = ssub.s32 1, %s6
  %s9 = scalar_select 0, %s8, %s6
  $region1: #{tpu_custom_call.1} parent=0
    #allocation2 [shape = 'u8[7168]{0}', space=vmem, size = 0x1c00, scoped, tag = 'input window, operand 0, single buffered']
    #allocation3 [shape = 's32[1]{0}', space=sflag, size = 0x4, scoped, tag = 'scoped memory for tpu_custom_call.1']
    #allocation4 [shape = 's32[1]{0}', space=sflag, size = 0x4, scoped, tag = 'scoped memory for tpu_custom_call.1']
    #allocation5 [shape = 'u8[200704]{0}', space=vmem, size = 0x31000, scoped, tag = 'input window, operand 1, single buffered']
    #allocation6 [shape = 's32[1]{0}', space=sflag, size = 0x4, scoped, tag = 'scoped memory for tpu_custom_call.1']
    #allocation7 [shape = 'u8[32768]{0}', space=vmem, size = 0x8000, scoped, tag = 'input window, operand 3, single buffered']
    #allocation8 [shape = 'u8[1024]{0}', space=vmem, size = 0x400, scoped, tag = 'output window, operand 0, single buffered']
    %10 = vsyncpa [#allocation3], 0
    %11 = vsyncpa [#allocation6], 0
    %12 = vsyncpa [#allocation4], 0
    // Predicated region
    $region2: #{tpu_custom_call.1} parent=1 // pred_check
      _
    $region3: #{tpu_custom_call.1} parent=1 // pred_check_branch
      %14 = sbr.rel (0) target = $region5
    $region4: #{tpu_custom_call.1} parent=1 // pred_region
      %s16 = ssub.s32 224, 224
      %17 = vsyncadd [#allocation3], %s16
      %s19 = sshll.u32 [#allocation2], 4
      %s20 = int_to_ptr.vmem [resolvable:$true] %s19
      %22 = dma.hbm_to_vmem [thread:$0]  %s0, 224, %s20, [#allocation3]
    $region5: #{tpu_custom_call.1} parent=1 // pred_fallthru
      _
    // Predicated region
    $region6: #{tpu_custom_call.1} parent=1 // pred_check
      _
    $region7: #{tpu_custom_call.1} parent=1 // pred_check_branch
      %24 = sbr.rel (0) target = $region9
    $region8: #{tpu_custom_call.1} parent=1 // pred_region
      %s26 = ssub.s32 6272, 6272
      %27 = vsyncadd [#allocation6], %s26
      %s28 = sshll.u32 [#allocation5], 4
      %s29 = int_to_ptr.vmem [resolvable:$true] %s28
      %34 = dma.hbm_to_vmem [thread:$0]  %s1, 6272, %s29, [#allocation6], 64, 64, 4
    $region9: #{tpu_custom_call.1} parent=1 // pred_fallthru
      _
    // Predicated region
    $region10: #{tpu_custom_call.1} parent=1 // pred_check
      _
    $region11: #{tpu_custom_call.1} parent=1 // pred_check_branch
      %36 = sbr.rel (0) target = $region13
    $region12: #{tpu_custom_call.1} parent=1 // pred_region
      _
    $region13: #{tpu_custom_call.1} parent=1 // pred_fallthru
      _
    // Predicated region
    $region14: #{tpu_custom_call.1} parent=1 // pred_check
      _
    $region15: #{tpu_custom_call.1} parent=1 // pred_check_branch
      %38 = sbr.rel (0) target = $region17
    $region16: #{tpu_custom_call.1} parent=1 // pred_region
      %s40 = ssub.s32 1024, 1024
      %41 = vsyncadd [#allocation6], %s40
      %s42 = sshll.u32 [#allocation7], 4
      %s43 = int_to_ptr.vmem [resolvable:$true] %s42
      %48 = dma.hbm_to_vmem [thread:$0]  %s3, 1024, %s43, [#allocation6], 64, 64, 4
    $region17: #{tpu_custom_call.1} parent=1 // pred_fallthru
      _
    // Predicated region
    $region18: #{tpu_custom_call.1} parent=1 // pred_check
      _
    $region19: #{tpu_custom_call.1} parent=1 // pred_check_branch
      %50 = sbr.rel (0) target = $region21
    $region20: #{tpu_custom_call.1} parent=1 // pred_region
      _
    $region21: #{tpu_custom_call.1} parent=1 // pred_fallthru
      _
    // Predicated region
    $region22: #{tpu_custom_call.1} parent=1 // pred_check
      _
    $region23: #{tpu_custom_call.1} parent=1 // pred_check_branch
      %52 = sbr.rel (0) target = $region25
    $region24: #{tpu_custom_call.1} parent=1 // pred_region
      %53 = dma.done [#allocation3], 224
    $region25: #{tpu_custom_call.1} parent=1 // pred_fallthru
      _
    // Predicated region
    $region26: #{tpu_custom_call.1} parent=1 // pred_check
      _
    $region27: #{tpu_custom_call.1} parent=1 // pred_check_branch
      %55 = sbr.rel (0) target = $region29
    $region28: #{tpu_custom_call.1} parent=1 // pred_region
      %56 = dma.done [#allocation6], 6272
    $region29: #{tpu_custom_call.1} parent=1 // pred_fallthru
      _
    // Predicated region
    $region30: #{tpu_custom_call.1} parent=1 // pred_check
      _
    $region31: #{tpu_custom_call.1} parent=1 // pred_check_branch
      %58 = sbr.rel (0) target = $region33
    $region32: #{tpu_custom_call.1} parent=1 // pred_region
      %59 = dma.done [#allocation6], 1024
    $region33: #{tpu_custom_call.1} parent=1 // pred_fallthru
      _
    %v61 = vld [vmem:[#allocation2] sm:$0xff]
    %v62 = vld [vmem:[#allocation2 + $0x8] sm:$0x3f]
    %v65 = vcombine.high %v61, %v61
    %v67 = vunpack.c.l.s4 1983009808
    %v68 = vunpack.c.0.s8 %v67
    %v69 = vlaneseq
    %v70 = vshrl.u32 %v69, 7
    %v71 = vsub.s32 %v68, %v70
    %v72 = vrot.slane %v61, %v71
    %v74 = vunpack.c.l.s4 1983009808
    %v75 = vunpack.c.0.s8 %v74
    %v76 = vlaneseq
    %v77 = vshrl.u32 %v76, 7
    %v78 = vsub.s32 %v75, %v77
    %v79 = vrot.slane %v65, %v78
    %v80 = vcombine.high %v72, %v72
    %v81 = vcombine.high %v79, %v79
    %v82 = vcombine.high %v62, %v62
    %v84 = vunpack.c.l.s4 1983009808
    %v85 = vunpack.c.0.s8 %v84
    %v86 = vlaneseq
    %v87 = vshrl.u32 %v86, 7
    %v88 = vsub.s32 %v85, %v87
    %v89 = vrot.slane %v62, %v88
    %v91 = vunpack.c.l.s4 1983009808
    %v92 = vunpack.c.0.s8 %v91
    %v93 = vlaneseq
    %v94 = vshrl.u32 %v93, 7
    %v95 = vsub.s32 %v92, %v94
    %v96 = vrot.slane %v82, %v95
    %v97 = vcombine.high %v89, %v89
    %v105 = vpack.c.bf16 %v72, %v72
    %v106 = vpack.c.bf16 %v80, %v80
    %v107 = vpack.c.bf16 %v79, %v79
    %v108 = vpack.c.bf16 %v81, %v81
    %v109 = vpack.c.bf16 %v89, %v89
    %v110 = vpack.c.bf16 %v97, %v97
    %v111 = vpack.c.bf16 %v96, %v96
    %v112 = vld [vmem:[#allocation5] sm:$0xf]
    %v113 = vld [vmem:[#allocation5 + $0x4] sm:$0xf]
    %v114 = vld [vmem:[#allocation5 + $0x8] sm:$0xf]
    %v115 = vld [vmem:[#allocation5 + $0xc] sm:$0xf]
    %v116 = vld [vmem:[#allocation5 + $0x10] sm:$0xf]
    %v117 = vld [vmem:[#allocation5 + $0x14] sm:$0xf]
    %v118 = vld [vmem:[#allocation5 + $0x18] sm:$0xf]
    %v119 = vld [vmem:[#allocation5 + $0x1c] sm:$0xf]
    %v120 = vld [vmem:[#allocation5 + $0x20] sm:$0xf]
    %v121 = vld [vmem:[#allocation5 + $0x24] sm:$0xf]
    %v122 = vld [vmem:[#allocation5 + $0x28] sm:$0xf]
    %v123 = vld [vmem:[#allocation5 + $0x2c] sm:$0xf]
    %v124 = vld [vmem:[#allocation5 + $0x30] sm:$0xf]
    %v125 = vld [vmem:[#allocation5 + $0x34] sm:$0xf]
    %v126 = vld [vmem:[#allocation5 + $0x38] sm:$0xf]
    %v127 = vld [vmem:[#allocation5 + $0x3c] sm:$0xf]
    %v128 = vld [vmem:[#allocation5 + $0x40] sm:$0xf]
    %v129 = vld [vmem:[#allocation5 + $0x44] sm:$0xf]
    %v130 = vld [vmem:[#allocation5 + $0x48] sm:$0xf]
    %v131 = vld [vmem:[#allocation5 + $0x4c] sm:$0xf]
    %v132 = vld [vmem:[#allocation5 + $0x50] sm:$0xf]
    %v133 = vld [vmem:[#allocation5 + $0x54] sm:$0xf]
    %v134 = vld [vmem:[#allocation5 + $0x58] sm:$0xf]
    %v135 = vld [vmem:[#allocation5 + $0x5c] sm:$0xf]
    %v136 = vld [vmem:[#allocation5 + $0x60] sm:$0xf]
    %v137 = vld [vmem:[#allocation5 + $0x64] sm:$0xf]
    %v138 = vld [vmem:[#allocation5 + $0x68] sm:$0xf]
    %v139 = vld [vmem:[#allocation5 + $0x6c] sm:$0xf]
    %v140 = vld [vmem:[#allocation5 + $0x70] sm:$0xf]
    %v141 = vld [vmem:[#allocation5 + $0x74] sm:$0xf]
    %v142 = vld [vmem:[#allocation5 + $0x78] sm:$0xf]
    %v143 = vld [vmem:[#allocation5 + $0x7c] sm:$0xf]
    %v144 = vld [vmem:[#allocation5 + $0x80] sm:$0xf]
    %v145 = vld [vmem:[#allocation5 + $0x84] sm:$0xf]
    %v146 = vld [vmem:[#allocation5 + $0x88] sm:$0xf]
    %v147 = vld [vmem:[#allocation5 + $0x8c] sm:$0xf]
    %v148 = vld [vmem:[#allocation5 + $0x90] sm:$0xf]
    %v149 = vld [vmem:[#allocation5 + $0x94] sm:$0xf]
    %v150 = vld [vmem:[#allocation5 + $0x98] sm:$0xf]
    %v151 = vld [vmem:[#allocation5 + $0x9c] sm:$0xf]
    %v152 = vld [vmem:[#allocation5 + $0xa0] sm:$0xf]
    %v153 = vld [vmem:[#allocation5 + $0xa4] sm:$0xf]
    %v154 = vld [vmem:[#allocation5 + $0xa8] sm:$0xf]
    %v155 = vld [vmem:[#allocation5 + $0xac] sm:$0xf]
    %v156 = vld [vmem:[#allocation5 + $0xb0] sm:$0xf]
    %v157 = vld [vmem:[#allocation5 + $0xb4] sm:$0xf]
    %v158 = vld [vmem:[#allocation5 + $0xb8] sm:$0xf]
    %v159 = vld [vmem:[#allocation5 + $0xbc] sm:$0xf]
    %v160 = vld [vmem:[#allocation5 + $0xc0] sm:$0xf]
    %v161 = vld [vmem:[#allocation5 + $0xc4] sm:$0xf]
    %v162 = vld [vmem:[#allocation5 + $0xc8] sm:$0xf]
    %v163 = vld [vmem:[#allocation5 + $0xcc] sm:$0xf]
    %v164 = vld [vmem:[#allocation5 + $0xd0] sm:$0xf]
    %v165 = vld [vmem:[#allocation5 + $0xd4] sm:$0xf]
    %v166 = vld [vmem:[#allocation5 + $0xd8] sm:$0xf]
    %v167 = vld [vmem:[#allocation5 + $0xdc] sm:$0xf]
    %v168 = vld [vmem:[#allocation5 + $0xe0] sm:$0xf]
    %v169 = vld [vmem:[#allocation5 + $0xe4] sm:$0xf]
    %v170 = vld [vmem:[#allocation5 + $0xe8] sm:$0xf]
    %v171 = vld [vmem:[#allocation5 + $0xec] sm:$0xf]
    %v172 = vld [vmem:[#allocation5 + $0xf0] sm:$0xf]
    %v173 = vld [vmem:[#allocation5 + $0xf4] sm:$0xf]
    %v174 = vld [vmem:[#allocation5 + $0xf8] sm:$0xf]
    %v175 = vld [vmem:[#allocation5 + $0xfc] sm:$0xf]
    %v176 = vld [vmem:[#allocation5 + $0x100] sm:$0xf]
    %v177 = vld [vmem:[#allocation5 + $0x104] sm:$0xf]
    %v178 = vld [vmem:[#allocation5 + $0x108] sm:$0xf]
    %v179 = vld [vmem:[#allocation5 + $0x10c] sm:$0xf]
    %v180 = vld [vmem:[#allocation5 + $0x110] sm:$0xf]
    %v181 = vld [vmem:[#allocation5 + $0x114] sm:$0xf]
    %v182 = vld [vmem:[#allocation5 + $0x118] sm:$0xf]
    %v183 = vld [vmem:[#allocation5 + $0x11c] sm:$0xf]
    %v184 = vld [vmem:[#allocation5 + $0x120] sm:$0xf]
    %v185 = vld [vmem:[#allocation5 + $0x124] sm:$0xf]
    %v186 = vld [vmem:[#allocation5 + $0x128] sm:$0xf]
    %v187 = vld [vmem:[#allocation5 + $0x12c] sm:$0xf]
    %v188 = vld [vmem:[#allocation5 + $0x130] sm:$0xf]
    %v189 = vld [vmem:[#allocation5 + $0x134] sm:$0xf]
    %v190 = vld [vmem:[#allocation5 + $0x138] sm:$0xf]
    %v191 = vld [vmem:[#allocation5 + $0x13c] sm:$0xf]
    %v192 = vld [vmem:[#allocation5 + $0x140] sm:$0xf]
    %v193 = vld [vmem:[#allocation5 + $0x144] sm:$0xf]
    %v194 = vld [vmem:[#allocation5 + $0x148] sm:$0xf]
    %v195 = vld [vmem:[#allocation5 + $0x14c] sm:$0xf]
    %v196 = vld [vmem:[#allocation5 + $0x150] sm:$0xf]
    %v197 = vld [vmem:[#allocation5 + $0x154] sm:$0xf]
    %v198 = vld [vmem:[#allocation5 + $0x158] sm:$0xf]
    %v199 = vld [vmem:[#allocation5 + $0x15c] sm:$0xf]
    %v200 = vld [vmem:[#allocation5 + $0x160] sm:$0xf]
    %v201 = vld [vmem:[#allocation5 + $0x164] sm:$0xf]
    %v202 = vld [vmem:[#allocation5 + $0x168] sm:$0xf]
    %v203 = vld [vmem:[#allocation5 + $0x16c] sm:$0xf]
    %v204 = vld [vmem:[#allocation5 + $0x170] sm:$0xf]
    %v205 = vld [vmem:[#allocation5 + $0x174] sm:$0xf]
    %v206 = vld [vmem:[#allocation5 + $0x178] sm:$0xf]
    %v207 = vld [vmem:[#allocation5 + $0x17c] sm:$0xf]
    %v208 = vld [vmem:[#allocation5 + $0x180] sm:$0xf]
    %v209 = vld [vmem:[#allocation5 + $0x184] sm:$0xf]
    %v210 = vld [vmem:[%s2] sm:$0x1]
    %v212 = vlaneseq
    %v213 = vshrl.u32 %v212, 7
    %v214 = vsub.s32 0, %v213
    %v215 = vrot.slane %v210, %v214
    %v315 = vunpack.c.l.b16 %v112
    %v316 = vunpack.c.l.b16 %v113
    %v317 = vunpack.c.l.b16 %v114
    %v318 = vunpack.c.l.b16 %v115
    %v319 = vunpack.c.l.b16 %v116
    %v320 = vunpack.c.l.b16 %v117
    %v321 = vunpack.c.l.b16 %v118
    %v322 = vunpack.c.l.b16 %v119
    %v323 = vunpack.c.l.b16 %v120
    %v324 = vunpack.c.l.b16 %v121
    %v325 = vunpack.c.l.b16 %v122
    %v326 = vunpack.c.l.b16 %v123
    %v327 = vunpack.c.l.b16 %v124
    %v328 = vunpack.c.l.b16 %v125
    %v329 = vunpack.c.l.b16 %v126
    %v330 = vunpack.c.l.b16 %v127
    %v331 = vunpack.c.l.b16 %v128
    %v332 = vunpack.c.l.b16 %v129
    %v333 = vunpack.c.l.b16 %v130
    %v334 = vunpack.c.l.b16 %v131
    %v335 = vunpack.c.l.b16 %v132
    %v336 = vunpack.c.l.b16 %v133
    %v337 = vunpack.c.l.b16 %v134
    %v338 = vunpack.c.l.b16 %v135
    %v339 = vunpack.c.l.b16 %v136
    %v340 = vunpack.c.l.b16 %v137
    %v341 = vunpack.c.l.b16 %v138
    %v342 = vunpack.c.l.b16 %v139
    %v343 = vunpack.c.l.b16 %v140
    %v344 = vunpack.c.l.b16 %v141
    %v345 = vunpack.c.l.b16 %v142
    %v346 = vunpack.c.l.b16 %v143
    %v347 = vunpack.c.l.b16 %v144
    %v348 = vunpack.c.l.b16 %v145
    %v349 = vunpack.c.l.b16 %v146
    %v350 = vunpack.c.l.b16 %v147
    %v351 = vunpack.c.l.b16 %v148
    %v352 = vunpack.c.l.b16 %v149
    %v353 = vunpack.c.l.b16 %v150
    %v354 = vunpack.c.l.b16 %v151
    %v355 = vunpack.c.l.b16 %v152
    %v356 = vunpack.c.l.b16 %v153
    %v357 = vunpack.c.l.b16 %v154
    %v358 = vunpack.c.l.b16 %v155
    %v359 = vunpack.c.l.b16 %v156
    %v360 = vunpack.c.l.b16 %v157
    %v361 = vunpack.c.l.b16 %v158
    %v362 = vunpack.c.l.b16 %v159
    %v363 = vunpack.c.l.b16 %v160
    %v364 = vunpack.c.l.b16 %v161
    %v365 = vunpack.c.l.b16 %v162
    %v366 = vunpack.c.l.b16 %v163
    %v367 = vunpack.c.l.b16 %v164
    %v368 = vunpack.c.l.b16 %v165
    %v369 = vunpack.c.l.b16 %v166
    %v370 = vunpack.c.l.b16 %v167
    %v371 = vunpack.c.l.b16 %v168
    %v372 = vunpack.c.l.b16 %v169
    %v373 = vunpack.c.l.b16 %v170
    %v374 = vunpack.c.l.b16 %v171
    %v375 = vunpack.c.l.b16 %v172
    %v376 = vunpack.c.l.b16 %v173
    %v377 = vunpack.c.l.b16 %v174
    %v378 = vunpack.c.l.b16 %v175
    %v379 = vunpack.c.l.b16 %v176
    %v380 = vunpack.c.l.b16 %v177
    %v381 = vunpack.c.l.b16 %v178
    %v382 = vunpack.c.l.b16 %v179
    %v383 = vunpack.c.l.b16 %v180
    %v384 = vunpack.c.l.b16 %v181
    %v385 = vunpack.c.l.b16 %v182
    %v386 = vunpack.c.l.b16 %v183
    %v387 = vunpack.c.l.b16 %v184
    %v388 = vunpack.c.l.b16 %v185
    %v389 = vunpack.c.l.b16 %v186
    %v390 = vunpack.c.l.b16 %v187
    %v391 = vunpack.c.l.b16 %v188
    %v392 = vunpack.c.l.b16 %v189
    %v393 = vunpack.c.l.b16 %v190
    %v394 = vunpack.c.l.b16 %v191
    %v395 = vunpack.c.l.b16 %v192
    %v396 = vunpack.c.l.b16 %v193
    %v397 = vunpack.c.l.b16 %v194
    %v398 = vunpack.c.l.b16 %v195
    %v399 = vunpack.c.l.b16 %v196
    %v400 = vunpack.c.l.b16 %v197
    %v401 = vunpack.c.l.b16 %v198
    %v402 = vunpack.c.l.b16 %v199
    %v403 = vunpack.c.l.b16 %v200
    %v404 = vunpack.c.l.b16 %v201
    %v405 = vunpack.c.l.b16 %v202
    %v406 = vunpack.c.l.b16 %v203
    %v407 = vunpack.c.l.b16 %v204
    %v408 = vunpack.c.l.b16 %v205
    %v409 = vunpack.c.l.b16 %v206
    %v410 = vunpack.c.l.b16 %v207
    %v411 = vunpack.c.l.b16 %v208
    %v412 = vunpack.c.l.b16 %v209
    %v413 = vpack.c.b16 %v316, %v315
    %v414 = vpack.c.b16 %v318, %v317
    %v415 = vpack.c.b16 %v320, %v319
    %v416 = vpack.c.b16 %v322, %v321
    %v417 = vpack.c.b16 %v324, %v323
    %v418 = vpack.c.b16 %v326, %v325
    %v419 = vpack.c.b16 %v328, %v327
    %v420 = vpack.c.b16 %v330, %v329
    %v421 = vpack.c.b16 %v332, %v331
    %v422 = vpack.c.b16 %v334, %v333
    %v423 = vpack.c.b16 %v336, %v335
    %v424 = vpack.c.b16 %v338, %v337
    %v425 = vpack.c.b16 %v340, %v339
    %v426 = vpack.c.b16 %v342, %v341
    %v427 = vpack.c.b16 %v344, %v343
    %v428 = vpack.c.b16 %v346, %v345
    %v429 = vpack.c.b16 %v348, %v347
    %v430 = vpack.c.b16 %v350, %v349
    %v431 = vpack.c.b16 %v352, %v351
    %v432 = vpack.c.b16 %v354, %v353
    %v433 = vpack.c.b16 %v356, %v355
    %v434 = vpack.c.b16 %v358, %v357
    %v435 = vpack.c.b16 %v360, %v359
    %v436 = vpack.c.b16 %v362, %v361
    %v437 = vpack.c.b16 %v364, %v363
    %v438 = vpack.c.b16 %v366, %v365
    %v439 = vpack.c.b16 %v368, %v367
    %v440 = vpack.c.b16 %v370, %v369
    %v441 = vpack.c.b16 %v372, %v371
    %v442 = vpack.c.b16 %v374, %v373
    %v443 = vpack.c.b16 %v376, %v375
    %v444 = vpack.c.b16 %v378, %v377
    %v445 = vpack.c.b16 %v380, %v379
    %v446 = vpack.c.b16 %v382, %v381
    %v447 = vpack.c.b16 %v384, %v383
    %v448 = vpack.c.b16 %v386, %v385
    %v449 = vpack.c.b16 %v388, %v387
    %v450 = vpack.c.b16 %v390, %v389
    %v451 = vpack.c.b16 %v392, %v391
    %v452 = vpack.c.b16 %v394, %v393
    %v453 = vpack.c.b16 %v396, %v395
    %v454 = vpack.c.b16 %v398, %v397
    %v455 = vpack.c.b16 %v400, %v399
    %v456 = vpack.c.b16 %v402, %v401
    %v457 = vpack.c.b16 %v404, %v403
    %v458 = vpack.c.b16 %v406, %v405
    %v459 = vpack.c.b16 %v408, %v407
    %v460 = vpack.c.b16 %v410, %v409
    %v461 = vpack.c.b16 %v412, %v411
    %vm511 = vcmask 130048
    %v513 = vsel %vm511, %v111, 0
    %515 = vmatprep.subr.bf16.mxu0 0
    %516 = vmatpush1.bf16.msra.mxu0 %v420
    %517 = vmatprep.subr.bf16.mxu0 0
    %518 = vmatpush1.bf16.msra.mxu0 %v419
    %519 = vmatprep.subr.bf16.mxu0 0
    %520 = vmatpush1.bf16.msra.mxu0 %v418
    %521 = vmatprep.subr.bf16.mxu0 0
    %522 = vmatpush1.bf16.msra.mxu0 %v417
    %523 = vmatprep.subr.bf16.mxu0 0
    %524 = vmatpush1.bf16.msra.mxu0 %v416
    %525 = vmatprep.subr.bf16.mxu0 0
    %526 = vmatpush1.bf16.msra.mxu0 %v415
    %527 = vmatprep.subr.bf16.mxu0 0
    %528 = vmatpush1.bf16.msra.mxu0 %v414
    %529 = vmatprep.subr.bf16.mxu0 0
    %530 = vmatpush1.bf16.msra.mxu0 %v413
    %531 = vmatprep.subr.bf16.mxu0 0
    %532 = vmatpush2.bf16.msra.mxu0 %v428
    %533 = vmatprep.subr.bf16.mxu0 0
    %534 = vmatpush2.bf16.msra.mxu0 %v427
    %535 = vmatprep.subr.bf16.mxu0 0
    %536 = vmatpush2.bf16.msra.mxu0 %v426
    %537 = vmatprep.subr.bf16.mxu0 0
    %538 = vmatpush2.bf16.msra.mxu0 %v425
    %539 = vmatprep.subr.bf16.mxu0 0
    %540 = vmatpush2.bf16.msra.mxu0 %v424
    %541 = vmatprep.subr.bf16.mxu0 0
    %542 = vmatpush2.bf16.msra.mxu0 %v423
    %543 = vmatprep.subr.bf16.mxu0 0
    %544 = vmatpush2.bf16.msra.mxu0 %v422
    %545 = vmatprep.subr.bf16.mxu0 0
    %546 = vmatpush2.bf16.msra.mxu0 %v421
    %547 = vmatprep.mubr.bf16.mxu0 %v106
    %548 = vmatmul.mubr.bf16.gmra.mxu0 %v105
    %v549 = vpop.f32.mrf.mxu0
    %v550 = vadd.f32 %v215, %v549
    %v551 = vpop.f32.mrf.mxu0
    %v552 = vpop.f32.mrf.mxu0
    %v553 = vpop.f32.mrf.mxu0
    %554 = vdwg.mxu0
    %555 = vmatprep.subr.bf16.mxu0 0
    %556 = vmatpush1.bf16.msra.mxu0 %v436
    %557 = vmatprep.subr.bf16.mxu0 0
    %558 = vmatpush1.bf16.msra.mxu0 %v435
    %559 = vmatprep.subr.bf16.mxu0 0
    %560 = vmatpush1.bf16.msra.mxu0 %v434
    %561 = vmatprep.subr.bf16.mxu0 0
    %562 = vmatpush1.bf16.msra.mxu0 %v433
    %563 = vmatprep.subr.bf16.mxu0 0
    %564 = vmatpush1.bf16.msra.mxu0 %v432
    %565 = vmatprep.subr.bf16.mxu0 0
    %566 = vmatpush1.bf16.msra.mxu0 %v431
    %567 = vmatprep.subr.bf16.mxu0 0
    %568 = vmatpush1.bf16.msra.mxu0 %v430
    %569 = vmatprep.subr.bf16.mxu0 0
    %570 = vmatpush1.bf16.msra.mxu0 %v429
    %571 = vmatprep.subr.bf16.mxu0 0
    %572 = vmatpush2.bf16.msra.mxu0 %v444
    %573 = vmatprep.subr.bf16.mxu0 0
    %574 = vmatpush2.bf16.msra.mxu0 %v443
    %575 = vmatprep.subr.bf16.mxu0 0
    %576 = vmatpush2.bf16.msra.mxu0 %v442
    %577 = vmatprep.subr.bf16.mxu0 0
    %578 = vmatpush2.bf16.msra.mxu0 %v441
    %579 = vmatprep.subr.bf16.mxu0 0
    %580 = vmatpush2.bf16.msra.mxu0 %v440
    %581 = vmatprep.subr.bf16.mxu0 0
    %582 = vmatpush2.bf16.msra.mxu0 %v439
    %583 = vmatprep.subr.bf16.mxu0 0
    %584 = vmatpush2.bf16.msra.mxu0 %v438
    %585 = vmatprep.subr.bf16.mxu0 0
    %586 = vmatpush2.bf16.msra.mxu0 %v437
    %587 = vmatprep.mubr.bf16.mxu0 %v108
    %588 = vmatmul.mubr.bf16.gmra.mxu0 %v107
    %v589 = vpop.f32.mrf.mxu0
    %v590 = vadd.f32 %v550, %v589
    %v591 = vpop.f32.mrf.mxu0
    %v592 = vpop.f32.mrf.mxu0
    %v593 = vpop.f32.mrf.mxu0
    %594 = vdwg.mxu0
    %595 = vmatprep.subr.bf16.mxu0 0
    %596 = vmatpush1.bf16.msra.mxu0 %v452
    %597 = vmatprep.subr.bf16.mxu0 0
    %598 = vmatpush1.bf16.msra.mxu0 %v451
    %599 = vmatprep.subr.bf16.mxu0 0
    %600 = vmatpush1.bf16.msra.mxu0 %v450
    %601 = vmatprep.subr.bf16.mxu0 0
    %602 = vmatpush1.bf16.msra.mxu0 %v449
    %603 = vmatprep.subr.bf16.mxu0 0
    %604 = vmatpush1.bf16.msra.mxu0 %v448
    %605 = vmatprep.subr.bf16.mxu0 0
    %606 = vmatpush1.bf16.msra.mxu0 %v447
    %607 = vmatprep.subr.bf16.mxu0 0
    %608 = vmatpush1.bf16.msra.mxu0 %v446
    %609 = vmatprep.subr.bf16.mxu0 0
    %610 = vmatpush1.bf16.msra.mxu0 %v445
    %611 = vmatprep.subr.bf16.mxu0 0
    %612 = vmatpush2.bf16.msra.mxu0 %v460
    %613 = vmatprep.subr.bf16.mxu0 0
    %614 = vmatpush2.bf16.msra.mxu0 %v459
    %615 = vmatprep.subr.bf16.mxu0 0
    %616 = vmatpush2.bf16.msra.mxu0 %v458
    %617 = vmatprep.subr.bf16.mxu0 0
    %618 = vmatpush2.bf16.msra.mxu0 %v457
    %619 = vmatprep.subr.bf16.mxu0 0
    %620 = vmatpush2.bf16.msra.mxu0 %v456
    %621 = vmatprep.subr.bf16.mxu0 0
    %622 = vmatpush2.bf16.msra.mxu0 %v455
    %623 = vmatprep.subr.bf16.mxu0 0
    %624 = vmatpush2.bf16.msra.mxu0 %v454
    %625 = vmatprep.subr.bf16.mxu0 0
    %626 = vmatpush2.bf16.msra.mxu0 %v453
    %627 = vmatprep.mubr.bf16.mxu0 %v110
    %628 = vmatmul.mubr.bf16.gmra.mxu0 %v109
    %v629 = vpop.f32.mrf.mxu0
    %v630 = vadd.f32 %v590, %v629
    %v631 = vpop.f32.mrf.mxu0
    %v632 = vpop.f32.mrf.mxu0
    %v633 = vpop.f32.mrf.mxu0
    %634 = vdwg.mxu0
    %635 = vmatprep.subr.bf16.mxu0 0
    %636 = vmatpush1.bf16.msra.mxu0 0
    %637 = vmatprep.subr.bf16.mxu0 0
    %638 = vmatpush1.bf16.msra.mxu0 0
    %639 = vmatprep.subr.bf16.mxu0 0
    %640 = vmatpush1.bf16.msra.mxu0 0
    %641 = vmatprep.subr.bf16.mxu0 0
    %642 = vmatpush1.bf16.msra.mxu0 0
    %643 = vmatprep.subr.bf16.mxu0 0
    %644 = vmatpush1.bf16.msra.mxu0 0
    %645 = vmatprep.subr.bf16.mxu0 0
    %646 = vmatpush1.bf16.msra.mxu0 0
    %647 = vmatprep.subr.bf16.mxu0 0
    %648 = vmatpush1.bf16.msra.mxu0 0
    %649 = vmatprep.subr.bf16.mxu0 0
    %650 = vmatpush1.bf16.msra.mxu0 %v461
    %651 = vmatprep.subr.bf16.mxu0 0
    %652 = vmatpush2.bf16.msra.mxu0 0
    %653 = vmatprep.subr.bf16.mxu0 0
    %654 = vmatpush2.bf16.msra.mxu0 0
    %655 = vmatprep.subr.bf16.mxu0 0
    %656 = vmatpush2.bf16.msra.mxu0 0
    %657 = vmatprep.subr.bf16.mxu0 0
    %658 = vmatpush2.bf16.msra.mxu0 0
    %659 = vmatprep.subr.bf16.mxu0 0
    %660 = vmatpush2.bf16.msra.mxu0 0
    %661 = vmatprep.subr.bf16.mxu0 0
    %662 = vmatpush2.bf16.msra.mxu0 0
    %663 = vmatprep.subr.bf16.mxu0 0
    %664 = vmatpush2.bf16.msra.mxu0 0
    %665 = vmatprep.subr.bf16.mxu0 0
    %666 = vmatpush2.bf16.msra.mxu0 0
    %667 = vmatprep.mubr.bf16.mxu0 0
    %668 = vmatmul.mubr.bf16.gmra.mxu0 %v513
    %v669 = vpop.f32.mrf.mxu0
    %v670 = vadd.f32 %v630, %v669
    %v671 = vpop.f32.mrf.mxu0
    %v672 = vpop.f32.mrf.mxu0
    %v673 = vpop.f32.mrf.mxu0
    %674 = vdwg.mxu0
    %v675 = vmax.f32 %v670, 0.0
    %v676 = vpack.c.bf16 %v675, %v675
    %v677 = vld [vmem:[#allocation7] sm:$0xf]
    %v678 = vld [vmem:[#allocation7 + $0x4] sm:$0xf]
    %v679 = vld [vmem:[#allocation7 + $0x8] sm:$0xf]
    %v680 = vld [vmem:[#allocation7 + $0xc] sm:$0xf]
    %v681 = vld [vmem:[#allocation7 + $0x10] sm:$0xf]
    %v682 = vld [vmem:[#allocation7 + $0x14] sm:$0xf]
    %v683 = vld [vmem:[#allocation7 + $0x18] sm:$0xf]
    %v684 = vld [vmem:[#allocation7 + $0x1c] sm:$0xf]
    %v685 = vld [vmem:[#allocation7 + $0x20] sm:$0xf]
    %v686 = vld [vmem:[#allocation7 + $0x24] sm:$0xf]
    %v687 = vld [vmem:[#allocation7 + $0x28] sm:$0xf]
    %v688 = vld [vmem:[#allocation7 + $0x2c] sm:$0xf]
    %v689 = vld [vmem:[#allocation7 + $0x30] sm:$0xf]
    %v690 = vld [vmem:[#allocation7 + $0x34] sm:$0xf]
    %v691 = vld [vmem:[#allocation7 + $0x38] sm:$0xf]
    %v692 = vld [vmem:[#allocation7 + $0x3c] sm:$0xf]
    %v693 = vld [vmem:[%s4] sm:$0x1]
    %v695 = vlaneseq
    %v696 = vshrl.u32 %v695, 7
    %v697 = vsub.s32 0, %v696
    %v698 = vrot.slane %v693, %v697
    %v716 = vunpack.c.l.b16 %v677
    %v717 = vunpack.c.l.b16 %v678
    %v718 = vunpack.c.l.b16 %v679
    %v719 = vunpack.c.l.b16 %v680
    %v720 = vunpack.c.l.b16 %v681
    %v721 = vunpack.c.l.b16 %v682
    %v722 = vunpack.c.l.b16 %v683
    %v723 = vunpack.c.l.b16 %v684
    %v724 = vunpack.c.l.b16 %v685
    %v725 = vunpack.c.l.b16 %v686
    %v726 = vunpack.c.l.b16 %v687
    %v727 = vunpack.c.l.b16 %v688
    %v728 = vunpack.c.l.b16 %v689
    %v729 = vunpack.c.l.b16 %v690
    %v730 = vunpack.c.l.b16 %v691
    %v731 = vunpack.c.l.b16 %v692
    %v732 = vpack.c.b16 %v717, %v716
    %v733 = vpack.c.b16 %v719, %v718
    %v734 = vpack.c.b16 %v721, %v720
    %v735 = vpack.c.b16 %v723, %v722
    %v736 = vpack.c.b16 %v725, %v724
    %v737 = vpack.c.b16 %v727, %v726
    %v738 = vpack.c.b16 %v729, %v728
    %v739 = vpack.c.b16 %v731, %v730
    %748 = vmatprep.subr.bf16.mxu0 0
    %749 = vmatpush1.bf16.msra.mxu0 %v739
    %750 = vmatprep.subr.bf16.mxu0 0
    %751 = vmatpush1.bf16.msra.mxu0 %v738
    %752 = vmatprep.subr.bf16.mxu0 0
    %753 = vmatpush1.bf16.msra.mxu0 %v737
    %754 = vmatprep.subr.bf16.mxu0 0
    %755 = vmatpush1.bf16.msra.mxu0 %v736
    %756 = vmatprep.subr.bf16.mxu0 0
    %757 = vmatpush1.bf16.msra.mxu0 %v735
    %758 = vmatprep.subr.bf16.mxu0 0
    %759 = vmatpush1.bf16.msra.mxu0 %v734
    %760 = vmatprep.subr.bf16.mxu0 0
    %761 = vmatpush1.bf16.msra.mxu0 %v733
    %762 = vmatprep.subr.bf16.mxu0 0
    %763 = vmatpush1.bf16.msra.mxu0 %v732
    %764 = vmatprep.subr.bf16.mxu0 0
    %765 = vmatpush2.bf16.msra.mxu0 0
    %766 = vmatprep.subr.bf16.mxu0 0
    %767 = vmatpush2.bf16.msra.mxu0 0
    %768 = vmatprep.subr.bf16.mxu0 0
    %769 = vmatpush2.bf16.msra.mxu0 0
    %770 = vmatprep.subr.bf16.mxu0 0
    %771 = vmatpush2.bf16.msra.mxu0 0
    %772 = vmatprep.subr.bf16.mxu0 0
    %773 = vmatpush2.bf16.msra.mxu0 0
    %774 = vmatprep.subr.bf16.mxu0 0
    %775 = vmatpush2.bf16.msra.mxu0 0
    %776 = vmatprep.subr.bf16.mxu0 0
    %777 = vmatpush2.bf16.msra.mxu0 0
    %778 = vmatprep.subr.bf16.mxu0 0
    %779 = vmatpush2.bf16.msra.mxu0 0
    %780 = vmatprep.mubr.bf16.mxu0 0
    %781 = vmatmul.mubr.bf16.gmra.mxu0 %v676
    %v782 = vpop.f32.mrf.mxu0
    %v783 = vadd.f32 %v698, %v782
    %v784 = vpop.f32.mrf.mxu0
    %v785 = vpop.f32.mrf.mxu0
    %v786 = vpop.f32.mrf.mxu0
    %787 = vdwg.mxu0
    %vm788 = vcmask 74752
    %789 = vst.msk [vmem:[#allocation8] sm:$0x3] %vm788, %v783
    // Predicated region
    $region34: #{tpu_custom_call.1} parent=1 // pred_check
      _
    $region35: #{tpu_custom_call.1} parent=1 // pred_check_branch
      %791 = sbr.rel (0) target = $region37
    $region36: #{tpu_custom_call.1} parent=1 // pred_region
      %s793 = ssub.s32 32, 32
      %794 = vsyncadd [#allocation4], %s793
      %s796 = sshll.u32 [#allocation8], 4
      %s797 = int_to_ptr.vmem [resolvable:$true] %s796
      %799 = dma.vmem_to_hbm [thread:$0]  %s797, 32, %s5, [#allocation4]
    $region37: #{tpu_custom_call.1} parent=1 // pred_fallthru
      _
    // Predicated region
    $region38: #{tpu_custom_call.1} parent=1 // pred_check
      _
    $region39: #{tpu_custom_call.1} parent=1 // pred_check_branch
      %801 = sbr.rel (0) target = $region41
    $region40: #{tpu_custom_call.1} parent=1 // pred_region
      %802 = dma.done [#allocation4], 32
    $region41: #{tpu_custom_call.1} parent=1 // pred_fallthru
      _
    %803 = vsyncpa [#allocation3], 1
    %804 = vsyncpa [#allocation6], 1
    %805 = vsyncpa [#allocation4], 1

</llo_original>
